<compile_context>
chip_gen: v6e
topology: v6e:2x2x1
jax: 0.10.0
libtpu: 0.0.40
codegen_flags: <defaults>
</compile_context>

<pallas_src>
import functools

import jax
import jax.numpy as jnp
from jax.experimental import pallas as pl
from jax.experimental.pallas import tpu as pltpu


def _round_up(x, m):
    return ((x + m - 1) // m) * m


def _pad2d(x, rows, cols, dtype):
    """Slice/zero-pad a 2-D array to (rows, cols) and cast."""
    x = x[: min(x.shape[0], rows), : min(x.shape[1], cols)]
    pr, pc = rows - x.shape[0], cols - x.shape[1]
    if pr or pc:
        x = jnp.pad(x, ((0, pr), (0, pc)))
    return x.astype(dtype)


def _sage_layer_kernel(a_ref, hsrc_ref, hdst_ref, dinv_ref, wcat_ref, b_ref,
                       o_ref, acc_ref, *, apply_relu):
    """Grid = (dst tiles [parallel], src/reduction tiles [arbitrary])."""
    k = pl.program_id(1)

    @pl.when(k == 0)
    def _():
        acc_ref[...] = jnp.zeros_like(acc_ref)

    # Accumulate un-normalized neighbor sum: (tm, tk)bf16 @ (tk, f_in_p)bf16 -> f32.
    acc_ref[...] += jnp.dot(a_ref[...], hsrc_ref[...],
                            preferred_element_type=jnp.float32)

    @pl.when(k == pl.num_programs(1) - 1)
    def _():
        # Exact mean: f32 accumulated sum scaled by f32 1/deg (VPU), then bf16.
        neigh = (acc_ref[...] * dinv_ref[...]).astype(hdst_ref.dtype)
        # Fused self + neighbor projection: one MXU pass with K = 2 * f_in_p.
        x = jnp.concatenate([hdst_ref[...], neigh], axis=-1)
        out = jnp.dot(x, wcat_ref[...],
                      preferred_element_type=jnp.float32) + b_ref[...]
        if apply_relu:
            out = jnp.maximum(out, 0.0)
        o_ref[...] = out.astype(o_ref.dtype)


def sage_layer(adj, h_src, w_self, w_neigh, bias, *, apply_relu, out_dtype):
    """One SAGEConv('mean') layer.

    adj    : (n_dst, n_src) binary 0/1 adjacency (dense sampled block).
    h_src  : (>= n_src, >= f_in) src-node features (may already be padded).
             DGL convention: dst nodes are the first n_dst rows of h_src.
    Returns padded output of shape (n_dst_p, f_out_p) in `out_dtype`.
    """
    n_dst, n_src = adj.shape
    f_in, f_out = w_self.shape

    # ---- padded / tiled geometry -------------------------------------------
    f_in_p = _round_up(f_in, 128)
    f_out_p = _round_up(f_out, 128)
    tm = min(256, _round_up(n_dst, 8))            # dst-row tile (parallel)
    n_dst_p = _round_up(n_dst, tm)
    n_src_p = _round_up(n_src, 128)               # lane-dense adjacency
    tk = 512 if n_src_p % 512 == 0 else (256 if n_src_p % 256 == 0 else 128)
    rows_p = max(n_src_p, n_dst_p)                # feature-matrix row padding

    # ---- host-side packing (pure layout plumbing) --------------------------
    deg = jnp.sum(adj.astype(jnp.float32), axis=1, keepdims=True)
    deg_inv = jnp.where(deg > 0, 1.0 / deg, 0.0)                  # (n_dst, 1)
    deg_inv_p = _pad2d(deg_inv, n_dst_p, 1, jnp.float32)

    a_p = _pad2d(adj, n_dst_p, n_src_p, jnp.bfloat16)             # binary, bf16
    h_p = _pad2d(h_src, rows_p, f_in_p, jnp.bfloat16)

    w_cat = jnp.concatenate(
        [_pad2d(w_self, f_in_p, f_out_p, jnp.bfloat16),
         _pad2d(w_neigh, f_in_p, f_out_p, jnp.bfloat16)], axis=0)  # (2*f_in_p, f_out_p)
    bias_p = _pad2d(bias.reshape(1, -1), 1, f_out_p, jnp.float32)

    grid = (n_dst_p // tm, n_src_p // tk)

    flops = 2 * n_dst_p * n_src_p * f_in_p + 2 * n_dst_p * (2 * f_in_p) * f_out_p
    bytes_accessed = (a_p.size * 2 + h_p.size * 2 + n_dst_p * f_in_p * 2
                      + deg_inv_p.size * 4 + w_cat.size * 2 + bias_p.size * 4
                      + n_dst_p * f_out_p * jnp.dtype(out_dtype).itemsize)

    kernel = functools.partial(_sage_layer_kernel, apply_relu=apply_relu)
    return pl.pallas_call(
        kernel,
        out_shape=jax.ShapeDtypeStruct((n_dst_p, f_out_p), out_dtype),
        grid_spec=pltpu.PrefetchScalarGridSpec(
            num_scalar_prefetch=0,
            grid=grid,
            in_specs=[
                pl.BlockSpec((tm, tk), lambda i, k: (i, k)),          # A (binary)
                pl.BlockSpec((tk, f_in_p), lambda i, k: (k, 0)),      # H_src tile
                pl.BlockSpec((tm, f_in_p), lambda i, k: (i, 0)),      # H_dst = leading rows of same H
                pl.BlockSpec((tm, 1), lambda i, k: (i, 0)),           # 1/deg
                pl.BlockSpec((2 * f_in_p, f_out_p), lambda i, k: (0, 0)),  # [W_self; W_neigh]
                pl.BlockSpec((1, f_out_p), lambda i, k: (0, 0)),      # bias
            ],
            out_specs=pl.BlockSpec((tm, f_out_p), lambda i, k: (i, 0)),
            scratch_shapes=[pltpu.VMEM((tm, f_in_p), jnp.float32)],
        ),
        compiler_params=pltpu.CompilerParams(
            dimension_semantics=("parallel", "arbitrary"),
            vmem_limit_bytes=32 * 1024 * 1024,
        ),
        cost_estimate=pl.CostEstimate(
            flops=int(flops), transcendentals=0,
            bytes_accessed=int(bytes_accessed)),
    )(a_p, h_p, h_p, deg_inv_p, w_cat, bias_p)


def dgl_sage_forward(blocks, h, params):
    """blocks: list of dense *binary* 0/1 adjacencies (n_dst_l, n_src_l);
    params: list of (w_self, w_neigh, bias) per layer.  Returns (n_dst_last, out_size) f32."""
    num_layers = len(params)
    for l, (adj, (w_self, w_neigh, bias)) in enumerate(zip(blocks, params)):
        is_last = (l == num_layers - 1)
        h = sage_layer(adj, h, w_self, w_neigh, bias,
                       apply_relu=not is_last,
                       out_dtype=jnp.float32 if is_last else jnp.bfloat16)
        # dropout(p=0.5) -> identity in eval mode
    n_dst_last = blocks[-1].shape[0]
    out_size = params[-1][0].shape[1]
    return h[:n_dst_last, :out_size]


def _make_block(key, n_dst, n_src):
    """Dense sampled bipartite block as a *binary* adjacency (mean is applied
    inside the kernel via 1/deg scaling)."""
    adj = jax.random.bernoulli(key, p=0.3, shape=(n_dst, n_src)).astype(jnp.float32)
    # guarantee at least one neighbor per dst node (self edge: dst i == src i)
    self_loop = jnp.zeros((n_dst, n_src), jnp.float32).at[
        jnp.arange(n_dst), jnp.arange(n_dst)].set(1.0)
    return jnp.maximum(adj, self_loop)


if __name__ == "__main__":
    in_size, hid_size, out_size, num_layers = 32, 64, 16, 3

    # node counts per hop (src of layer l == dst of layer l-1)
    node_counts = [64, 32, 16, 8]  # [src0, dst0=src1, dst1=src2, dst2]

    key = jax.random.PRNGKey(0)
    keys = jax.random.split(key, 4 * num_layers + 1)  # blocks + 3 per layer + h0

    # blocks (dense binary adjacency; mean normalization happens in-kernel)
    blocks = []
    for l in range(num_layers):
        blocks.append(_make_block(keys[l], node_counts[l + 1], node_counts[l]))

    # layer parameters (deterministic init from PRNGKey(0) splits)
    feat_sizes = [in_size] + [hid_size] * (num_layers - 1) + [out_size]
    params = []
    for l in range(num_layers):
        f_in, f_out = feat_sizes[l], feat_sizes[l + 1]
        kw1 = keys[num_layers + 3 * l + 0]
        kw2 = keys[num_layers + 3 * l + 1]
        kb = keys[num_layers + 3 * l + 2]
        scale = 1.0 / jnp.sqrt(jnp.float32(f_in))
        w_self = jax.random.normal(kw1, (f_in, f_out), jnp.float32) * scale
        w_neigh = jax.random.normal(kw2, (f_in, f_out), jnp.float32) * scale
        bias = jax.random.normal(kb, (1, f_out), jnp.float32) * 0.01
        params.append((w_self, w_neigh, bias))

    # input features for the outermost src nodes
    h0 = jax.random.normal(keys[-1], (node_counts[0], in_size), jnp.float32)

    out = dgl_sage_forward(blocks, h0, params)
    out = jax.block_until_ready(out)
    assert out.shape == (node_counts[-1], out_size), out.shape
    assert bool(jnp.all(jnp.isfinite(out)))
    print("KERNEL_OK")
</pallas_src>

<mosaic_0001>
module attributes {stable_mosaic.version = 11 : i64} {
  func.func @_sage_layer_kernel(%arg0: i32, %arg1: i32, %arg2: memref<32x128xbf16, #tpu.memory_space<vmem>>, %arg3: memref<128x128xbf16, #tpu.memory_space<vmem>>, %arg4: memref<32x128xbf16, #tpu.memory_space<vmem>>, %arg5: memref<32x1xf32, #tpu.memory_space<vmem>>, %arg6: memref<256x128xbf16, #tpu.memory_space<vmem>>, %arg7: memref<1x128xf32, #tpu.memory_space<vmem>>, %arg8: memref<32x128xbf16, #tpu.memory_space<vmem>>, %arg9: memref<32x128xf32, #tpu.memory_space<vmem>>) attributes {dimension_semantics = [#tpu.dimension_semantics<parallel>, #tpu.dimension_semantics<arbitrary>], iteration_bounds = array<i64: 1, 1>, scalar_prefetch = 0 : i64, scratch_operands = 1 : i64, tpu.core_type = #tpu.core_type<tc>, window_params = [{transform_indices = @transform_0, window_bounds = array<i64: 32, 128>}, {transform_indices = @transform_1, window_bounds = array<i64: 128, 128>}, {transform_indices = @transform_2, window_bounds = array<i64: 32, 128>}, {transform_indices = @transform_3, window_bounds = array<i64: 32, 1>}, {pipeline_mode = #tpu.pipeline_mode<synchronous>, transform_indices = @transform_4, window_bounds = array<i64: 256, 128>}, {pipeline_mode = #tpu.pipeline_mode<synchronous>, transform_indices = @transform_5, window_bounds = array<i64: 1, 128>}, {transform_indices = @transform_6, window_bounds = array<i64: 32, 128>}]} {
    %c0_i32 = arith.constant 0 : i32
    %0 = arith.cmpi eq, %arg1, %c0_i32 : i32
    %1 = arith.extui %0 : i1 to i32
    %c0_i32_0 = arith.constant 0 : i32
    %2 = arith.cmpi ne, %1, %c0_i32_0 : i32
    scf.if %2 {
      %cst_10 = arith.constant 0.000000e+00 : f32
      %12 = vector.broadcast %cst_10 : f32 to vector<32x128xf32>
      %c0_11 = arith.constant 0 : index
      %c0_12 = arith.constant 0 : index
      %13 = vector.load %arg9[%c0_11, %c0_12] : memref<32x128xf32, #tpu.memory_space<vmem>>, vector<32x128xf32>
      tpu.vector_store %arg9[%c0_11, %c0_12], %12 {strides = array<i32>} : memref<32x128xf32, #tpu.memory_space<vmem>>, vector<32x128xf32>,
    } else {
    }
    %c0 = arith.constant 0 : index
    %c0_1 = arith.constant 0 : index
    %3 = vector.load %arg9[%c0, %c0_1] : memref<32x128xf32, #tpu.memory_space<vmem>>, vector<32x128xf32>
    %c0_2 = arith.constant 0 : index
    %c0_3 = arith.constant 0 : index
    %4 = vector.load %arg2[%c0_2, %c0_3] : memref<32x128xbf16, #tpu.memory_space<vmem>>, vector<32x128xbf16>
    %c0_4 = arith.constant 0 : index
    %c0_5 = arith.constant 0 : index
    %5 = vector.load %arg3[%c0_4, %c0_5] : memref<128x128xbf16, #tpu.memory_space<vmem>>, vector<128x128xbf16>
    %cst = arith.constant dense<0.000000e+00> : vector<32x128xf32>
    %6 = tpu.matmul %4, %5, %cst {dimension_numbers = #tpu.dot_dimension_numbers<[1], [0], [0], [1], [0, 0, 1, 1], [], []>} : vector<32x128xbf16>, vector<128x128xbf16>, vector<32x128xf32> -> vector<32x128xf32>
    %7 = arith.addf %3, %6 : vector<32x128xf32>
    %c0_6 = arith.constant 0 : index
    %c0_7 = arith.constant 0 : index
    %8 = vector.load %arg9[%c0_6, %c0_7] : memref<32x128xf32, #tpu.memory_space<vmem>>, vector<32x128xf32>
    tpu.vector_store %arg9[%c0_6, %c0_7], %7 {strides = array<i32>} : memref<32x128xf32, #tpu.memory_space<vmem>>, vector<32x128xf32>,
    %c0_i32_8 = arith.constant 0 : i32
    %9 = arith.cmpi eq, %arg1, %c0_i32_8 : i32
    %10 = arith.extui %9 : i1 to i32
    %c0_i32_9 = arith.constant 0 : i32
    %11 = arith.cmpi ne, %10, %c0_i32_9 : i32
    scf.if %11 {
      %c0_10 = arith.constant 0 : index
      %c0_11 = arith.constant 0 : index
      %12 = vector.load %arg9[%c0_10, %c0_11] : memref<32x128xf32, #tpu.memory_space<vmem>>, vector<32x128xf32>
      %c0_12 = arith.constant 0 : index
      %c0_13 = arith.constant 0 : index
      %13 = vector.load %arg5[%c0_12, %c0_13] : memref<32x1xf32, #tpu.memory_space<vmem>>, vector<32x1xf32>
      %14 = vector.broadcast %13 : vector<32x1xf32> to vector<32x128xf32>
      %15 = arith.mulf %12, %14 : vector<32x128xf32>
      %16 = arith.truncf %15 : vector<32x128xf32> to vector<32x128xbf16>
      %c0_14 = arith.constant 0 : index
      %c0_15 = arith.constant 0 : index
      %17 = vector.load %arg4[%c0_14, %c0_15] : memref<32x128xbf16, #tpu.memory_space<vmem>>, vector<32x128xbf16>
      %18 = tpu.concatenate %17, %16 in 1 : vector<32x128xbf16>, vector<32x128xbf16> -> vector<32x256xbf16>
      %c0_16 = arith.constant 0 : index
      %c0_17 = arith.constant 0 : index
      %19 = vector.load %arg6[%c0_16, %c0_17] : memref<256x128xbf16, #tpu.memory_space<vmem>>, vector<256x128xbf16>
      %cst_18 = arith.constant dense<0.000000e+00> : vector<32x128xf32>
      %20 = tpu.matmul %18, %19, %cst_18 {dimension_numbers = #tpu.dot_dimension_numbers<[1], [0], [0], [1], [0, 0, 1, 1], [], []>} : vector<32x256xbf16>, vector<256x128xbf16>, vector<32x128xf32> -> vector<32x128xf32>
      %c0_19 = arith.constant 0 : index
      %c0_20 = arith.constant 0 : index
      %21 = vector.load %arg7[%c0_19, %c0_20] : memref<1x128xf32, #tpu.memory_space<vmem>>, vector<1x128xf32>
      %22 = vector.broadcast %21 : vector<1x128xf32> to vector<32x128xf32>
      %23 = arith.addf %20, %22 : vector<32x128xf32>
      %cst_21 = arith.constant 0.000000e+00 : f32
      %24 = vector.broadcast %cst_21 : f32 to vector<32x128xf32>
      %25 = arith.maximumf %23, %24 : vector<32x128xf32>
      %26 = arith.truncf %25 : vector<32x128xf32> to vector<32x128xbf16>
      %c0_22 = arith.constant 0 : index
      %c0_23 = arith.constant 0 : index
      %27 = vector.load %arg8[%c0_22, %c0_23] : memref<32x128xbf16, #tpu.memory_space<vmem>>, vector<32x128xbf16>
      tpu.vector_store %arg8[%c0_22, %c0_23], %26 {strides = array<i32>} : memref<32x128xbf16, #tpu.memory_space<vmem>>, vector<32x128xbf16>,
    } else {
    }
    return
  }
  func.func @transform_0(%arg0: i32, %arg1: i32) -> (i32, i32) {
    %c0_i32 = arith.constant 0 : i32
    return %arg0, %arg1 : i32, i32
  }
  func.func @transform_1(%arg0: i32, %arg1: i32) -> (i32, i32) {
    %c0_i32 = arith.constant 0 : i32
    %c0_i32_0 = arith.constant 0 : i32
    return %arg1, %c0_i32 : i32, i32
  }
  func.func @transform_2(%arg0: i32, %arg1: i32) -> (i32, i32) {
    %c0_i32 = arith.constant 0 : i32
    %c0_i32_0 = arith.constant 0 : i32
    return %arg0, %c0_i32 : i32, i32
  }
  func.func @transform_3(%arg0: i32, %arg1: i32) -> (i32, i32) {
    %c0_i32 = arith.constant 0 : i32
    %c0_i32_0 = arith.constant 0 : i32
    return %arg0, %c0_i32 : i32, i32
  }
  func.func @transform_4(%arg0: i32, %arg1: i32) -> (i32, i32) {
    %c0_i32 = arith.constant 0 : i32
    %c0_i32_0 = arith.constant 0 : i32
    %c0_i32_1 = arith.constant 0 : i32
    return %c0_i32, %c0_i32_0 : i32, i32
  }
  func.func @transform_5(%arg0: i32, %arg1: i32) -> (i32, i32) {
    %c0_i32 = arith.constant 0 : i32
    %c0_i32_0 = arith.constant 0 : i32
    %c0_i32_1 = arith.constant 0 : i32
    return %c0_i32, %c0_i32_0 : i32, i32
  }
  func.func @transform_6(%arg0: i32, %arg1: i32) -> (i32, i32) {
    %c0_i32 = arith.constant 0 : i32
    %c0_i32_0 = arith.constant 0 : i32
    return %arg0, %c0_i32 : i32, i32
  }
}

</mosaic_0001>

<llo_original>
// kernel: tpu_custom_call.1
$region0: #{tpu_custom_call.1}
  #allocation0 [shape = 'u32[]', space=smem, size = 0x4, offset = 0x4, fixed_abs, tag = 'smem constant byte address 0x4 - core index']
  #allocation1 [shape = 'u32[144,128]{1,0:T(1,128)}', space=vmem, size = 0x12000, scoped, tag = 'internal scratch']
  #allocation2 [shape = 'f32[32,128]{1,0:T(8,128)}', space=vmem, size = 0x4000, scoped, tag = 'scratch operand']
  %s0 = inlined_call_operand.vmem [shape: bf16[32,128], index: 0, kind: input, shape index: {}]
  %s1 = inlined_call_operand.hbm [shape: bf16[128,128], index: 1, kind: input, shape index: {}]
  %s2 = inlined_call_operand.hbm [shape: bf16[128,128], index: 2, kind: input, shape index: {}]
  %s3 = inlined_call_operand.vmem [shape: f32[32,1], index: 3, kind: input, shape index: {}]
  %s4 = inlined_call_operand.hbm [shape: bf16[256,128], index: 4, kind: input, shape index: {}]
  %s5 = inlined_call_operand.vmem [shape: f32[1,128], index: 5, kind: input, shape index: {}]
  %s6 = inlined_call_operand.hbm [shape: bf16[32,128], index: 6, kind: output, shape index: {}]
  %s7 = sld [smem:[#allocation0]]
  $region54: #{tpu_custom_call.1} parent=0
    _
  %s9 = ssub.s32 1, %s7
  %s10 = scalar_select 0, %s9, %s7
  $region1: #{tpu_custom_call.1} parent=0
    #allocation3 [shape = 'u8[32768]{0}', space=vmem, size = 0x8000, scoped, tag = 'input window, operand 1, single buffered']
    #allocation4 [shape = 's32[1]{0}', space=sflag, size = 0x4, scoped, tag = 'scoped memory for tpu_custom_call.1']
    #allocation5 [shape = 's32[1]{0}', space=sflag, size = 0x4, scoped, tag = 'scoped memory for tpu_custom_call.1']
    #allocation6 [shape = 'u8[8192]{0}', space=vmem, size = 0x2000, scoped, tag = 'input window, operand 2, single buffered']
    #allocation7 [shape = 's32[1]{0}', space=sflag, size = 0x4, scoped, tag = 'scoped memory for tpu_custom_call.1']
    #allocation8 [shape = 'u8[65536]{0}', space=vmem, size = 0x10000, scoped, tag = 'input window, operand 4, single buffered']
    #allocation9 [shape = 'u8[8192]{0}', space=vmem, size = 0x2000, scoped, tag = 'output window, operand 0, single buffered']
    %11 = vsyncpa [#allocation4], 0
    %12 = vsyncpa [#allocation7], 0
    %13 = vsyncpa [#allocation5], 0
    // Predicated region
    $region2: #{tpu_custom_call.1} parent=1 // pred_check
      _
    $region3: #{tpu_custom_call.1} parent=1 // pred_check_branch
      %15 = sbr.rel (0) target = $region5
    $region4: #{tpu_custom_call.1} parent=1 // pred_region
      _
    $region5: #{tpu_custom_call.1} parent=1 // pred_fallthru
      _
    // Predicated region
    $region6: #{tpu_custom_call.1} parent=1 // pred_check
      _
    $region7: #{tpu_custom_call.1} parent=1 // pred_check_branch
      %17 = sbr.rel (0) target = $region9
    $region8: #{tpu_custom_call.1} parent=1 // pred_region
      %s19 = ssub.s32 1024, 1024
      %20 = vsyncadd [#allocation4], %s19
      %s21 = sshll.u32 [#allocation3], 4
      %s22 = int_to_ptr.vmem [resolvable:$true] %s21
      %27 = dma.hbm_to_vmem [thread:$0]  %s1, 1024, %s22, [#allocation4], 64, 64, 4
    $region9: #{tpu_custom_call.1} parent=1 // pred_fallthru
      _
    // Predicated region
    $region10: #{tpu_custom_call.1} parent=1 // pred_check
      _
    $region11: #{tpu_custom_call.1} parent=1 // pred_check_branch
      %29 = sbr.rel (0) target = $region13
    $region12: #{tpu_custom_call.1} parent=1 // pred_region
      %s31 = ssub.s32 256, 256
      %32 = vsyncadd [#allocation7], %s31
      %s33 = sshll.u32 [#allocation6], 4
      %s34 = int_to_ptr.vmem [resolvable:$true] %s33
      %39 = dma.hbm_to_vmem [thread:$0]  %s2, 256, %s34, [#allocation7], 64, 64, 4
    $region13: #{tpu_custom_call.1} parent=1 // pred_fallthru
      _
    // Predicated region
    $region14: #{tpu_custom_call.1} parent=1 // pred_check
      _
    $region15: #{tpu_custom_call.1} parent=1 // pred_check_branch
      %41 = sbr.rel (0) target = $region17
    $region16: #{tpu_custom_call.1} parent=1 // pred_region
      _
    $region17: #{tpu_custom_call.1} parent=1 // pred_fallthru
      _
    // Predicated region
    $region18: #{tpu_custom_call.1} parent=1 // pred_check
      _
    $region19: #{tpu_custom_call.1} parent=1 // pred_check_branch
      %43 = sbr.rel (0) target = $region21
    $region20: #{tpu_custom_call.1} parent=1 // pred_region
      %s45 = ssub.s32 2048, 2048
      %46 = vsyncadd [#allocation7], %s45
      %s47 = sshll.u32 [#allocation8], 4
      %s48 = int_to_ptr.vmem [resolvable:$true] %s47
      %53 = dma.hbm_to_vmem [thread:$0]  %s4, 2048, %s48, [#allocation7], 64, 64, 4
    $region21: #{tpu_custom_call.1} parent=1 // pred_fallthru
      _
    // Predicated region
    $region22: #{tpu_custom_call.1} parent=1 // pred_check
      _
    $region23: #{tpu_custom_call.1} parent=1 // pred_check_branch
      %55 = sbr.rel (0) target = $region25
    $region24: #{tpu_custom_call.1} parent=1 // pred_region
      _
    $region25: #{tpu_custom_call.1} parent=1 // pred_fallthru
      _
    // Predicated region
    $region26: #{tpu_custom_call.1} parent=1 // pred_check
      _
    $region27: #{tpu_custom_call.1} parent=1 // pred_check_branch
      %57 = sbr.rel (0) target = $region29
    $region28: #{tpu_custom_call.1} parent=1 // pred_region
      %58 = dma.done [#allocation4], 1024
    $region29: #{tpu_custom_call.1} parent=1 // pred_fallthru
      _
    // Predicated region
    $region30: #{tpu_custom_call.1} parent=1 // pred_check
      _
    $region31: #{tpu_custom_call.1} parent=1 // pred_check_branch
      %60 = sbr.rel (0) target = $region33
    $region32: #{tpu_custom_call.1} parent=1 // pred_region
      %61 = dma.done [#allocation7], 256
    $region33: #{tpu_custom_call.1} parent=1 // pred_fallthru
      _
    // Predicated region
    $region34: #{tpu_custom_call.1} parent=1 // pred_check
      _
    $region35: #{tpu_custom_call.1} parent=1 // pred_check_branch
      %63 = sbr.rel (0) target = $region37
    $region36: #{tpu_custom_call.1} parent=1 // pred_region
      %64 = dma.done [#allocation7], 2048
    $region37: #{tpu_custom_call.1} parent=1 // pred_fallthru
      _
    %p66 = scmp.eq.s32.totalorder 0, 0
    // Predicated region
    $region38: #{tpu_custom_call.1} parent=1 // pred_check
      %p67 = pneg %p66
    $region39: #{tpu_custom_call.1} parent=1 // pred_check_branch
      %69 = sbr.rel (%p67) target = $region41
    $region40: #{tpu_custom_call.1} parent=1 // pred_region
      %70 = vst [vmem:[#allocation2] sm:$0xff] 0.0
      %71 = vst [vmem:[#allocation2 + $0x8] sm:$0xff] 0.0
      %72 = vst [vmem:[#allocation2 + $0x10] sm:$0xff] 0.0
      %73 = vst [vmem:[#allocation2 + $0x18] sm:$0xff] 0.0
    $region41: #{tpu_custom_call.1} parent=1 // pred_fallthru
      _
    %v74 = vld [vmem:[#allocation2] sm:$0xff]
    %v75 = vld [vmem:[#allocation2 + $0x8] sm:$0xff]
    %v76 = vld [vmem:[#allocation2 + $0x10] sm:$0xff]
    %v77 = vld [vmem:[#allocation2 + $0x18] sm:$0xff]
    %v78 = vld [vmem:[%s0] sm:$0xf]
    %v79 = vld [vmem:[%s0 + $0x4] sm:$0xf]
    %v80 = vld [vmem:[%s0 + $0x8] sm:$0xf]
    %v81 = vld [vmem:[%s0 + $0xc] sm:$0xf]
    %v82 = vld [vmem:[#allocation3] sm:$0xf]
    %v83 = vld [vmem:[#allocation3 + $0x4] sm:$0xf]
    %v84 = vld [vmem:[#allocation3 + $0x8] sm:$0xf]
    %v85 = vld [vmem:[#allocation3 + $0xc] sm:$0xf]
    %v86 = vld [vmem:[#allocation3 + $0x10] sm:$0xf]
    %v87 = vld [vmem:[#allocation3 + $0x14] sm:$0xf]
    %v88 = vld [vmem:[#allocation3 + $0x18] sm:$0xf]
    %v89 = vld [vmem:[#allocation3 + $0x1c] sm:$0xf]
    %v90 = vld [vmem:[#allocation3 + $0x20] sm:$0xf]
    %v91 = vld [vmem:[#allocation3 + $0x24] sm:$0xf]
    %v92 = vld [vmem:[#allocation3 + $0x28] sm:$0xf]
    %v93 = vld [vmem:[#allocation3 + $0x2c] sm:$0xf]
    %v94 = vld [vmem:[#allocation3 + $0x30] sm:$0xf]
    %v95 = vld [vmem:[#allocation3 + $0x34] sm:$0xf]
    %v96 = vld [vmem:[#allocation3 + $0x38] sm:$0xf]
    %v97 = vld [vmem:[#allocation3 + $0x3c] sm:$0xf]
    %v102 = vunpack.c.l.b16 %v78
    %v103 = vunpack.c.l.b16 %v79
    %v104 = vunpack.c.l.b16 %v80
    %v105 = vunpack.c.l.b16 %v81
    %v106 = vpack.c.b16 %v103, %v102
    %v107 = vpack.c.b16 %v105, %v104
    %v126 = vunpack.c.l.b16 %v82
    %v127 = vunpack.c.l.b16 %v83
    %v128 = vunpack.c.l.b16 %v84
    %v129 = vunpack.c.l.b16 %v85
    %v130 = vunpack.c.l.b16 %v86
    %v131 = vunpack.c.l.b16 %v87
    %v132 = vunpack.c.l.b16 %v88
    %v133 = vunpack.c.l.b16 %v89
    %v134 = vunpack.c.l.b16 %v90
    %v135 = vunpack.c.l.b16 %v91
    %v136 = vunpack.c.l.b16 %v92
    %v137 = vunpack.c.l.b16 %v93
    %v138 = vunpack.c.l.b16 %v94
    %v139 = vunpack.c.l.b16 %v95
    %v140 = vunpack.c.l.b16 %v96
    %v141 = vunpack.c.l.b16 %v97
    %v142 = vpack.c.b16 %v127, %v126
    %v143 = vpack.c.b16 %v129, %v128
    %v144 = vpack.c.b16 %v131, %v130
    %v145 = vpack.c.b16 %v133, %v132
    %v146 = vpack.c.b16 %v135, %v134
    %v147 = vpack.c.b16 %v137, %v136
    %v148 = vpack.c.b16 %v139, %v138
    %v149 = vpack.c.b16 %v141, %v140
    %158 = vmatprep.subr.bf16.mxu0 0
    %159 = vmatpush1.bf16.msra.mxu0 %v149
    %160 = vmatprep.subr.bf16.mxu0 0
    %161 = vmatpush1.bf16.msra.mxu0 %v148
    %162 = vmatprep.subr.bf16.mxu0 0
    %163 = vmatpush1.bf16.msra.mxu0 %v147
    %164 = vmatprep.subr.bf16.mxu0 0
    %165 = vmatpush1.bf16.msra.mxu0 %v146
    %166 = vmatprep.subr.bf16.mxu0 0
    %167 = vmatpush1.bf16.msra.mxu0 %v145
    %168 = vmatprep.subr.bf16.mxu0 0
    %169 = vmatpush1.bf16.msra.mxu0 %v144
    %170 = vmatprep.subr.bf16.mxu0 0
    %171 = vmatpush1.bf16.msra.mxu0 %v143
    %172 = vmatprep.subr.bf16.mxu0 0
    %173 = vmatpush1.bf16.msra.mxu0 %v142
    %174 = vmatprep.subr.bf16.mxu0 0
    %175 = vmatpush2.bf16.msra.mxu0 0
    %176 = vmatprep.subr.bf16.mxu0 0
    %177 = vmatpush2.bf16.msra.mxu0 0
    %178 = vmatprep.subr.bf16.mxu0 0
    %179 = vmatpush2.bf16.msra.mxu0 0
    %180 = vmatprep.subr.bf16.mxu0 0
    %181 = vmatpush2.bf16.msra.mxu0 0
    %182 = vmatprep.subr.bf16.mxu0 0
    %183 = vmatpush2.bf16.msra.mxu0 0
    %184 = vmatprep.subr.bf16.mxu0 0
    %185 = vmatpush2.bf16.msra.mxu0 0
    %186 = vmatprep.subr.bf16.mxu0 0
    %187 = vmatpush2.bf16.msra.mxu0 0
    %188 = vmatprep.subr.bf16.mxu0 0
    %189 = vmatpush2.bf16.msra.mxu0 0
    %190 = vmatprep.mubr.bf16.mxu0 0
    %191 = vmatmul.mubr.bf16.gmra.mxu0 %v106
    %v192 = vpop.f32.mrf.mxu0
    %v193 = vadd.f32 0.0, %v192
    %v194 = vpop.f32.mrf.mxu0
    %v195 = vpop.f32.mrf.mxu0
    %v196 = vadd.f32 0.0, %v195
    %v197 = vpop.f32.mrf.mxu0
    %198 = vmatprep.mubr.bf16.mxu0 0
    %199 = vmatmul.mubr.bf16.gmra.mxu0 %v107
    %v200 = vpop.f32.mrf.mxu0
    %v201 = vadd.f32 0.0, %v200
    %v202 = vpop.f32.mrf.mxu0
    %v203 = vpop.f32.mrf.mxu0
    %v204 = vadd.f32 0.0, %v203
    %v205 = vpop.f32.mrf.mxu0
    %206 = vdwg.mxu0
    %v207 = vadd.f32 %v74, %v193
    %v208 = vadd.f32 %v75, %v196
    %v209 = vadd.f32 %v76, %v201
    %v210 = vadd.f32 %v77, %v204
    %211 = vst [vmem:[#allocation2] sm:$0xff] %v207
    %212 = vst [vmem:[#allocation2 + $0x8] sm:$0xff] %v208
    %213 = vst [vmem:[#allocation2 + $0x10] sm:$0xff] %v209
    %214 = vst [vmem:[#allocation2 + $0x18] sm:$0xff] %v210
    // Predicated region
    $region42: #{tpu_custom_call.1} parent=1 // pred_check
      %p215 = pneg %p66
    $region43: #{tpu_custom_call.1} parent=1 // pred_check_branch
      %217 = sbr.rel (%p215) target = $region45
    $region44: #{tpu_custom_call.1} parent=1 // pred_region
      %v218 = vld [vmem:[#allocation2] sm:$0xff]
      %v219 = vld [vmem:[#allocation2 + $0x8] sm:$0xff]
      %v220 = vld [vmem:[#allocation2 + $0x10] sm:$0xff]
      %v221 = vld [vmem:[#allocation2 + $0x18] sm:$0xff]
      %v222 = vld [vmem:[%s3] sm:$0xff]
      %v223 = vld [vmem:[%s3 + $0x8] sm:$0xff]
      %v224 = vld [vmem:[%s3 + $0x10] sm:$0xff]
      %v225 = vld [vmem:[%s3 + $0x18] sm:$0xff]
      %227 = vset.pattern.permute.xlu0 0
      %228 = vperm.xlu0 %227, %v222
      %v229 = vpop.permute.xlu0 %228
      %232 = vset.pattern.permute.xlu0 0
      %233 = vperm.xlu0 %232, %v223
      %v234 = vpop.permute.xlu0 %233
      %237 = vset.pattern.permute.xlu0 0
      %238 = vperm.xlu0 %237, %v224
      %v239 = vpop.permute.xlu0 %238
      %242 = vset.pattern.permute.xlu0 0
      %243 = vperm.xlu0 %242, %v225
      %v244 = vpop.permute.xlu0 %243
      %v246 = vmul.f32 %v218, %v229
      %v247 = vmul.f32 %v219, %v234
      %v248 = vmul.f32 %v220, %v239
      %v249 = vmul.f32 %v221, %v244
      %v250 = vpack.c.bf16 %v247, %v246
      %v251 = vpack.c.bf16 %v249, %v248
      %v252 = vld [vmem:[#allocation6] sm:$0xf]
      %v253 = vld [vmem:[#allocation6 + $0x4] sm:$0xf]
      %v254 = vld [vmem:[#allocation6 + $0x8] sm:$0xf]
      %v255 = vld [vmem:[#allocation6 + $0xc] sm:$0xf]
      %v260 = vunpack.c.l.b16 %v252
      %v261 = vunpack.c.l.b16 %v253
      %v262 = vunpack.c.l.b16 %v254
      %v263 = vunpack.c.l.b16 %v255
      %v264 = vpack.c.b16 %v261, %v260
      %v265 = vpack.c.b16 %v263, %v262
      %v268 = vld [vmem:[#allocation8] sm:$0xf]
      %v269 = vld [vmem:[#allocation8 + $0x4] sm:$0xf]
      %v270 = vld [vmem:[#allocation8 + $0x8] sm:$0xf]
      %v271 = vld [vmem:[#allocation8 + $0xc] sm:$0xf]
      %v272 = vld [vmem:[#allocation8 + $0x10] sm:$0xf]
      %v273 = vld [vmem:[#allocation8 + $0x14] sm:$0xf]
      %v274 = vld [vmem:[#allocation8 + $0x18] sm:$0xf]
      %v275 = vld [vmem:[#allocation8 + $0x1c] sm:$0xf]
      %v276 = vld [vmem:[#allocation8 + $0x20] sm:$0xf]
      %v277 = vld [vmem:[#allocation8 + $0x24] sm:$0xf]
      %v278 = vld [vmem:[#allocation8 + $0x28] sm:$0xf]
      %v279 = vld [vmem:[#allocation8 + $0x2c] sm:$0xf]
      %v280 = vld [vmem:[#allocation8 + $0x30] sm:$0xf]
      %v281 = vld [vmem:[#allocation8 + $0x34] sm:$0xf]
      %v282 = vld [vmem:[#allocation8 + $0x38] sm:$0xf]
      %v283 = vld [vmem:[#allocation8 + $0x3c] sm:$0xf]
      %v284 = vld [vmem:[#allocation8 + $0x40] sm:$0xf]
      %v285 = vld [vmem:[#allocation8 + $0x44] sm:$0xf]
      %v286 = vld [vmem:[#allocation8 + $0x48] sm:$0xf]
      %v287 = vld [vmem:[#allocation8 + $0x4c] sm:$0xf]
      %v288 = vld [vmem:[#allocation8 + $0x50] sm:$0xf]
      %v289 = vld [vmem:[#allocation8 + $0x54] sm:$0xf]
      %v290 = vld [vmem:[#allocation8 + $0x58] sm:$0xf]
      %v291 = vld [vmem:[#allocation8 + $0x5c] sm:$0xf]
      %v292 = vld [vmem:[#allocation8 + $0x60] sm:$0xf]
      %v293 = vld [vmem:[#allocation8 + $0x64] sm:$0xf]
      %v294 = vld [vmem:[#allocation8 + $0x68] sm:$0xf]
      %v295 = vld [vmem:[#allocation8 + $0x6c] sm:$0xf]
      %v296 = vld [vmem:[#allocation8 + $0x70] sm:$0xf]
      %v297 = vld [vmem:[#allocation8 + $0x74] sm:$0xf]
      %v298 = vld [vmem:[#allocation8 + $0x78] sm:$0xf]
      %v299 = vld [vmem:[#allocation8 + $0x7c] sm:$0xf]
      %v300 = vld [vmem:[%s5] sm:$0x1]
      %v302 = vlaneseq
      %v303 = vshrl.u32 %v302, 7
      %v304 = vsub.s32 0, %v303
      %v305 = vrot.slane %v300, %v304
      %v339 = vunpack.c.l.b16 %v268
      %v340 = vunpack.c.l.b16 %v269
      %v341 = vunpack.c.l.b16 %v270
      %v342 = vunpack.c.l.b16 %v271
      %v343 = vunpack.c.l.b16 %v272
      %v344 = vunpack.c.l.b16 %v273
      %v345 = vunpack.c.l.b16 %v274
      %v346 = vunpack.c.l.b16 %v275
      %v347 = vunpack.c.l.b16 %v276
      %v348 = vunpack.c.l.b16 %v277
      %v349 = vunpack.c.l.b16 %v278
      %v350 = vunpack.c.l.b16 %v279
      %v351 = vunpack.c.l.b16 %v280
      %v352 = vunpack.c.l.b16 %v281
      %v353 = vunpack.c.l.b16 %v282
      %v354 = vunpack.c.l.b16 %v283
      %v355 = vunpack.c.l.b16 %v284
      %v356 = vunpack.c.l.b16 %v285
      %v357 = vunpack.c.l.b16 %v286
      %v358 = vunpack.c.l.b16 %v287
      %v359 = vunpack.c.l.b16 %v288
      %v360 = vunpack.c.l.b16 %v289
      %v361 = vunpack.c.l.b16 %v290
      %v362 = vunpack.c.l.b16 %v291
      %v363 = vunpack.c.l.b16 %v292
      %v364 = vunpack.c.l.b16 %v293
      %v365 = vunpack.c.l.b16 %v294
      %v366 = vunpack.c.l.b16 %v295
      %v367 = vunpack.c.l.b16 %v296
      %v368 = vunpack.c.l.b16 %v297
      %v369 = vunpack.c.l.b16 %v298
      %v370 = vunpack.c.l.b16 %v299
      %v371 = vpack.c.b16 %v340, %v339
      %v372 = vpack.c.b16 %v342, %v341
      %v373 = vpack.c.b16 %v344, %v343
      %v374 = vpack.c.b16 %v346, %v345
      %v375 = vpack.c.b16 %v348, %v347
      %v376 = vpack.c.b16 %v350, %v349
      %v377 = vpack.c.b16 %v352, %v351
      %v378 = vpack.c.b16 %v354, %v353
      %v379 = vpack.c.b16 %v356, %v355
      %v380 = vpack.c.b16 %v358, %v357
      %v381 = vpack.c.b16 %v360, %v359
      %v382 = vpack.c.b16 %v362, %v361
      %v383 = vpack.c.b16 %v364, %v363
      %v384 = vpack.c.b16 %v366, %v365
      %v385 = vpack.c.b16 %v368, %v367
      %v386 = vpack.c.b16 %v370, %v369
      %403 = vmatprep.subr.bf16.mxu0 0
      %404 = vmatpush1.bf16.msra.mxu0 %v378
      %405 = vmatprep.subr.bf16.mxu0 0
      %406 = vmatpush1.bf16.msra.mxu0 %v377
      %407 = vmatprep.subr.bf16.mxu0 0
      %408 = vmatpush1.bf16.msra.mxu0 %v376
      %409 = vmatprep.subr.bf16.mxu0 0
      %410 = vmatpush1.bf16.msra.mxu0 %v375
      %411 = vmatprep.subr.bf16.mxu0 0
      %412 = vmatpush1.bf16.msra.mxu0 %v374
      %413 = vmatprep.subr.bf16.mxu0 0
      %414 = vmatpush1.bf16.msra.mxu0 %v373
      %415 = vmatprep.subr.bf16.mxu0 0
      %416 = vmatpush1.bf16.msra.mxu0 %v372
      %417 = vmatprep.subr.bf16.mxu0 0
      %418 = vmatpush1.bf16.msra.mxu0 %v371
      %419 = vmatprep.subr.bf16.mxu0 0
      %420 = vmatpush2.bf16.msra.mxu0 %v386
      %421 = vmatprep.subr.bf16.mxu0 0
      %422 = vmatpush2.bf16.msra.mxu0 %v385
      %423 = vmatprep.subr.bf16.mxu0 0
      %424 = vmatpush2.bf16.msra.mxu0 %v384
      %425 = vmatprep.subr.bf16.mxu0 0
      %426 = vmatpush2.bf16.msra.mxu0 %v383
      %427 = vmatprep.subr.bf16.mxu0 0
      %428 = vmatpush2.bf16.msra.mxu0 %v382
      %429 = vmatprep.subr.bf16.mxu0 0
      %430 = vmatpush2.bf16.msra.mxu0 %v381
      %431 = vmatprep.subr.bf16.mxu0 0
      %432 = vmatpush2.bf16.msra.mxu0 %v380
      %433 = vmatprep.subr.bf16.mxu0 0
      %434 = vmatpush2.bf16.msra.mxu0 %v379
      %435 = vmatprep.mubr.bf16.mxu0 %v250
      %436 = vmatmul.mubr.bf16.gmra.mxu0 %v264
      %v437 = vpop.f32.mrf.mxu0
      %v438 = vadd.f32 %v305, %v437
      %v439 = vpop.f32.mrf.mxu0
      %v440 = vpop.f32.mrf.mxu0
      %v441 = vadd.f32 %v305, %v440
      %v442 = vpop.f32.mrf.mxu0
      %443 = vmatprep.mubr.bf16.mxu0 %v251
      %444 = vmatmul.mubr.bf16.gmra.mxu0 %v265
      %v445 = vpop.f32.mrf.mxu0
      %v446 = vadd.f32 %v305, %v445
      %v447 = vpop.f32.mrf.mxu0
      %v448 = vpop.f32.mrf.mxu0
      %v449 = vadd.f32 %v305, %v448
      %v450 = vpop.f32.mrf.mxu0
      %451 = vdwg.mxu0
      %v452 = vmax.f32 %v438, 0.0
      %v453 = vmax.f32 %v441, 0.0
      %v454 = vmax.f32 %v446, 0.0
      %v455 = vmax.f32 %v449, 0.0
      %v456 = vpack.c.bf16 %v453, %v452
      %v457 = vpack.c.bf16 %v455, %v454
      %v460 = vunpack.c.l.b16 %v456
      %v461 = vunpack.c.h.b16 %v456
      %v462 = vunpack.c.l.b16 %v457
      %v463 = vunpack.c.h.b16 %v457
      %v464 = vpack.c.b16 %v460, %v460
      %v465 = vpack.c.b16 %v461, %v461
      %v466 = vpack.c.b16 %v462, %v462
      %v467 = vpack.c.b16 %v463, %v463
      %472 = vst [vmem:[#allocation9] sm:$0xf] %v464
      %473 = vst [vmem:[#allocation9 + $0x4] sm:$0xf] %v465
      %474 = vst [vmem:[#allocation9 + $0x8] sm:$0xf] %v466
      %475 = vst [vmem:[#allocation9 + $0xc] sm:$0xf] %v467
    $region45: #{tpu_custom_call.1} parent=1 // pred_fallthru
      _
    // Predicated region
    $region46: #{tpu_custom_call.1} parent=1 // pred_check
      _
    $region47: #{tpu_custom_call.1} parent=1 // pred_check_branch
      %477 = sbr.rel (0) target = $region49
    $region48: #{tpu_custom_call.1} parent=1 // pred_region
      %s479 = ssub.s32 256, 256
      %480 = vsyncadd [#allocation5], %s479
      %s481 = sshll.u32 [#allocation9], 4
      %s482 = int_to_ptr.vmem [resolvable:$true] %s481
      %487 = dma.vmem_to_hbm [thread:$0]  %s482, 256, %s6, [#allocation5], 64, 64, 4
    $region49: #{tpu_custom_call.1} parent=1 // pred_fallthru
      _
    // Predicated region
    $region50: #{tpu_custom_call.1} parent=1 // pred_check
      _
    $region51: #{tpu_custom_call.1} parent=1 // pred_check_branch
      %489 = sbr.rel (0) target = $region53
    $region52: #{tpu_custom_call.1} parent=1 // pred_region
      %490 = dma.done [#allocation5], 256
    $region53: #{tpu_custom_call.1} parent=1 // pred_fallthru
      _
    %491 = vsyncpa [#allocation4], 1
    %492 = vsyncpa [#allocation7], 1
    %493 = vsyncpa [#allocation5], 1

</llo_original>
